<compile_context>
chip_gen: v6e
topology: v6e:2x2x1
jax: 0.10.0
libtpu: 0.0.40
codegen_flags: <defaults>
</compile_context>

<pallas_src>
import jax
import jax.numpy as jnp
from jax.experimental import pallas as pl
from jax.experimental.pallas import tpu as pltpu


_LANE = 128
# block_B * tile_L cap. Per-step VMEM (f32, C_in=4 padded to 8 sublanes,
# C_out=8, double-buffered in+out) ~= 128 bytes/lane -> 128K lanes ~= 16 MiB,
# comfortably under the 32 MiB limit below on every generation.
_MAX_LANES_PER_STEP = 128 * 1024
_VMEM_LIMIT_BYTES = 32 * 1024 * 1024


def _round_up(x, m):
    return (x + m - 1) // m * m


def _largest_divisor_leq(n, cap):
    for d in range(min(n, cap), 0, -1):
        if n % d == 0:
            return d
    return 1


def _choose_tiling(B, L_pad):
    """Pick (block_B, tile_L). L_pad is already a multiple of 128."""
    tile_L = min(_MAX_LANES_PER_STEP, L_pad)
    max_block_B = max(1, _MAX_LANES_PER_STEP // tile_L)
    block_B = _largest_divisor_leq(B, max_block_B)

    def nblocks(b_blk, l_tile):
        return (B // b_blk) * pl.cdiv(L_pad, l_tile)

    # Keep >= 4 grid blocks when possible: 2 per v7x TensorCore and enough
    # steps for input/output double-buffering to overlap.
    while block_B > 1 and nblocks(block_B, tile_L) < 4:
        block_B = _largest_divisor_leq(B, block_B - 1)
    while tile_L > _LANE and nblocks(block_B, tile_L) < 4:
        tile_L = max(_LANE, _round_up(tile_L // 2, _LANE))
    return block_B, tile_L


def _outconv_kernel(x_ref, w_ref, b_ref, o_ref):
    # x_ref: (block_B, C_in, tile_L)  VMEM
    # w_ref: (C_out, C_in)            SMEM scalars
    # b_ref: (C_out,)                 SMEM scalars
    # o_ref: (block_B, C_out, tile_L) VMEM (lane-dense along tile_L)
    c_out, c_in = w_ref.shape
    for o in range(c_out):  # fully unrolled VPU MAC chain; no MXU, no relayout
        acc = x_ref[:, 0, :].astype(jnp.float32) * w_ref[o, 0]
        for c in range(1, c_in):
            acc = acc + x_ref[:, c, :].astype(jnp.float32) * w_ref[o, c]
        o_ref[:, o, :] = (acc + b_ref[o]).astype(o_ref.dtype)


def out_conv_block_1x1(x_ncl, weight, bias):
    """Pointwise Conv1d (kernel_size=1), native NCL layout.

    x_ncl:  (B, C_in, L)      float32
    weight: (C_out, C_in, 1)  float32  (PyTorch Conv1d weight layout)
    bias:   (C_out,)          float32
    returns (B, C_out, L)     float32
    """
    B, C_in, L = x_ncl.shape
    C_out, _, ks = weight.shape
    assert ks == 1, "only kernel_size=1 path implemented"

    w2d = weight[:, :, 0]  # (C_out, C_in) -> SMEM scalars

    # Pad L up to a multiple of 128 so every lane tile is a full 128-multiple
    # (unmasked, lane-dense stores) and ragged L never forces a giant block.
    L_pad = _round_up(L, _LANE)
    if L_pad != L:
        x_ncl = jnp.pad(x_ncl, ((0, 0), (0, 0), (0, L_pad - L)))

    block_B, tile_L = _choose_tiling(B, L_pad)
    grid = (B // block_B, pl.cdiv(L_pad, tile_L))

    out = pl.pallas_call(
        _outconv_kernel,
        out_shape=jax.ShapeDtypeStruct((B, C_out, L_pad), x_ncl.dtype),
        grid_spec=pl.GridSpec(
            grid=grid,
            in_specs=[
                # x: (block_B, C_in, tile_L) blocks streamed from HBM.
                pl.BlockSpec((block_B, C_in, tile_L), lambda b, l: (b, 0, l)),
                # weight / bias: tiny, resident in SMEM for the whole kernel.
                pl.BlockSpec(memory_space=pltpu.MemorySpace.SMEM),
                pl.BlockSpec(memory_space=pltpu.MemorySpace.SMEM),
            ],
            out_specs=pl.BlockSpec((block_B, C_out, tile_L),
                                   lambda b, l: (b, 0, l)),
        ),
        compiler_params=pltpu.CompilerParams(
            dimension_semantics=("parallel", "parallel"),
            vmem_limit_bytes=_VMEM_LIMIT_BYTES,
        ),
    )(x_ncl, w2d, bias)

    if L_pad != L:
        out = out[:, :, :L]
    return out


if __name__ == "__main__":
    # Small shapes consistent with Conv1d forward: x is (batch, in_channels, length)
    B, C_in, C_out, L = 2, 4, 8, 16

    key = jax.random.PRNGKey(0)
    kx, kw, kb = jax.random.split(key, 3)
    x = jax.random.normal(kx, (B, C_in, L), dtype=jnp.float32)
    # Deterministic synthetic parameters (shapes match nn.Conv1d(C_in, C_out, 1))
    weight = jax.random.normal(kw, (C_out, C_in, 1), dtype=jnp.float32) * 0.1
    bias = jax.random.normal(kb, (C_out,), dtype=jnp.float32) * 0.1

    out = out_conv_block_1x1(x, weight, bias)
    out = jax.block_until_ready(out)

    # Pure-JAX reference (same semantics as nn.Conv1d with kernel_size=1).
    ref = jnp.einsum("bcl,oc->bol", x, weight[:, :, 0]) + bias[None, :, None]
    assert out.shape == (B, C_out, L)
    assert jnp.allclose(out, ref, atol=1e-5, rtol=1e-5)

    print("KERNEL_OK")
</pallas_src>

<mosaic_0001>
module attributes {stable_mosaic.version = 11 : i64} {
  func.func @_outconv_kernel(%arg0: i32, %arg1: i32, %arg2: memref<1x4x128xf32, #tpu.memory_space<vmem>>, %arg3: memref<8x4xf32, #tpu.memory_space<smem>>, %arg4: memref<8xf32, #tpu.memory_space<smem>>, %arg5: memref<1x8x128xf32, #tpu.memory_space<vmem>>) attributes {dimension_semantics = [#tpu.dimension_semantics<parallel>, #tpu.dimension_semantics<parallel>], iteration_bounds = array<i64: 2, 1>, scalar_prefetch = 0 : i64, scratch_operands = 0 : i64, tpu.core_type = #tpu.core_type<tc>, window_params = [{transform_indices = @transform_0, window_bounds = array<i64: 1, 4, 128>}, {transform_indices = @transform_1, window_bounds = array<i64: 8, 4>}, {transform_indices = @transform_2, window_bounds = array<i64: 8>}, {transform_indices = @transform_3, window_bounds = array<i64: 1, 8, 128>}]} {
    %c0 = arith.constant 0 : index
    %c0_0 = arith.constant 0 : index
    %c0_1 = arith.constant 0 : index
    %0 = vector.load %arg2[%c0, %c0_0, %c0_1] : memref<1x4x128xf32, #tpu.memory_space<vmem>>, vector<1x1x128xf32>
    %1 = vector.shape_cast %0 : vector<1x1x128xf32> to vector<1x128xf32>
    %c0_2 = arith.constant 0 : index
    %c0_3 = arith.constant 0 : index
    %2 = memref.load %arg3[%c0_2, %c0_3] : memref<8x4xf32, #tpu.memory_space<smem>>
    %3 = vector.broadcast %2 : f32 to vector<1x128xf32>
    %4 = arith.mulf %1, %3 : vector<1x128xf32>
    %c0_4 = arith.constant 0 : index
    %c1 = arith.constant 1 : index
    %c0_5 = arith.constant 0 : index
    %5 = vector.load %arg2[%c0_4, %c1, %c0_5] : memref<1x4x128xf32, #tpu.memory_space<vmem>>, vector<1x1x128xf32>
    %6 = vector.shape_cast %5 : vector<1x1x128xf32> to vector<1x128xf32>
    %c0_6 = arith.constant 0 : index
    %c1_7 = arith.constant 1 : index
    %7 = memref.load %arg3[%c0_6, %c1_7] : memref<8x4xf32, #tpu.memory_space<smem>>
    %8 = vector.broadcast %7 : f32 to vector<1x128xf32>
    %9 = arith.mulf %6, %8 : vector<1x128xf32>
    %10 = arith.addf %4, %9 : vector<1x128xf32>
    %c0_8 = arith.constant 0 : index
    %c2 = arith.constant 2 : index
    %c0_9 = arith.constant 0 : index
    %11 = vector.load %arg2[%c0_8, %c2, %c0_9] : memref<1x4x128xf32, #tpu.memory_space<vmem>>, vector<1x1x128xf32>
    %12 = vector.shape_cast %11 : vector<1x1x128xf32> to vector<1x128xf32>
    %c0_10 = arith.constant 0 : index
    %c2_11 = arith.constant 2 : index
    %13 = memref.load %arg3[%c0_10, %c2_11] : memref<8x4xf32, #tpu.memory_space<smem>>
    %14 = vector.broadcast %13 : f32 to vector<1x128xf32>
    %15 = arith.mulf %12, %14 : vector<1x128xf32>
    %16 = arith.addf %10, %15 : vector<1x128xf32>
    %c0_12 = arith.constant 0 : index
    %c3 = arith.constant 3 : index
    %c0_13 = arith.constant 0 : index
    %17 = vector.load %arg2[%c0_12, %c3, %c0_13] : memref<1x4x128xf32, #tpu.memory_space<vmem>>, vector<1x1x128xf32>
    %18 = vector.shape_cast %17 : vector<1x1x128xf32> to vector<1x128xf32>
    %c0_14 = arith.constant 0 : index
    %c3_15 = arith.constant 3 : index
    %19 = memref.load %arg3[%c0_14, %c3_15] : memref<8x4xf32, #tpu.memory_space<smem>>
    %20 = vector.broadcast %19 : f32 to vector<1x128xf32>
    %21 = arith.mulf %18, %20 : vector<1x128xf32>
    %22 = arith.addf %16, %21 : vector<1x128xf32>
    %c0_16 = arith.constant 0 : index
    %23 = memref.load %arg4[%c0_16] : memref<8xf32, #tpu.memory_space<smem>>
    %24 = vector.broadcast %23 : f32 to vector<1x128xf32>
    %25 = arith.addf %22, %24 : vector<1x128xf32>
    %c0_17 = arith.constant 0 : index
    %c0_18 = arith.constant 0 : index
    %c0_19 = arith.constant 0 : index
    %26 = vector.load %arg5[%c0_17, %c0_18, %c0_19] : memref<1x8x128xf32, #tpu.memory_space<vmem>>, vector<1x1x128xf32>
    %27 = vector.shape_cast %26 : vector<1x1x128xf32> to vector<1x128xf32>
    %28 = vector.shape_cast %25 : vector<1x128xf32> to vector<1x1x128xf32>
    tpu.vector_store %arg5[%c0_17, %c0_18, %c0_19], %28 {strides = array<i32>} : memref<1x8x128xf32, #tpu.memory_space<vmem>>, vector<1x1x128xf32>,
    %c0_20 = arith.constant 0 : index
    %c0_21 = arith.constant 0 : index
    %c0_22 = arith.constant 0 : index
    %29 = vector.load %arg2[%c0_20, %c0_21, %c0_22] : memref<1x4x128xf32, #tpu.memory_space<vmem>>, vector<1x1x128xf32>
    %30 = vector.shape_cast %29 : vector<1x1x128xf32> to vector<1x128xf32>
    %c1_23 = arith.constant 1 : index
    %c0_24 = arith.constant 0 : index
    %31 = memref.load %arg3[%c1_23, %c0_24] : memref<8x4xf32, #tpu.memory_space<smem>>
    %32 = vector.broadcast %31 : f32 to vector<1x128xf32>
    %33 = arith.mulf %30, %32 : vector<1x128xf32>
    %c0_25 = arith.constant 0 : index
    %c1_26 = arith.constant 1 : index
    %c0_27 = arith.constant 0 : index
    %34 = vector.load %arg2[%c0_25, %c1_26, %c0_27] : memref<1x4x128xf32, #tpu.memory_space<vmem>>, vector<1x1x128xf32>
    %35 = vector.shape_cast %34 : vector<1x1x128xf32> to vector<1x128xf32>
    %c1_28 = arith.constant 1 : index
    %c1_29 = arith.constant 1 : index
    %36 = memref.load %arg3[%c1_28, %c1_29] : memref<8x4xf32, #tpu.memory_space<smem>>
    %37 = vector.broadcast %36 : f32 to vector<1x128xf32>
    %38 = arith.mulf %35, %37 : vector<1x128xf32>
    %39 = arith.addf %33, %38 : vector<1x128xf32>
    %c0_30 = arith.constant 0 : index
    %c2_31 = arith.constant 2 : index
    %c0_32 = arith.constant 0 : index
    %40 = vector.load %arg2[%c0_30, %c2_31, %c0_32] : memref<1x4x128xf32, #tpu.memory_space<vmem>>, vector<1x1x128xf32>
    %41 = vector.shape_cast %40 : vector<1x1x128xf32> to vector<1x128xf32>
    %c1_33 = arith.constant 1 : index
    %c2_34 = arith.constant 2 : index
    %42 = memref.load %arg3[%c1_33, %c2_34] : memref<8x4xf32, #tpu.memory_space<smem>>
    %43 = vector.broadcast %42 : f32 to vector<1x128xf32>
    %44 = arith.mulf %41, %43 : vector<1x128xf32>
    %45 = arith.addf %39, %44 : vector<1x128xf32>
    %c0_35 = arith.constant 0 : index
    %c3_36 = arith.constant 3 : index
    %c0_37 = arith.constant 0 : index
    %46 = vector.load %arg2[%c0_35, %c3_36, %c0_37] : memref<1x4x128xf32, #tpu.memory_space<vmem>>, vector<1x1x128xf32>
    %47 = vector.shape_cast %46 : vector<1x1x128xf32> to vector<1x128xf32>
    %c1_38 = arith.constant 1 : index
    %c3_39 = arith.constant 3 : index
    %48 = memref.load %arg3[%c1_38, %c3_39] : memref<8x4xf32, #tpu.memory_space<smem>>
    %49 = vector.broadcast %48 : f32 to vector<1x128xf32>
    %50 = arith.mulf %47, %49 : vector<1x128xf32>
    %51 = arith.addf %45, %50 : vector<1x128xf32>
    %c1_40 = arith.constant 1 : index
    %52 = memref.load %arg4[%c1_40] : memref<8xf32, #tpu.memory_space<smem>>
    %53 = vector.broadcast %52 : f32 to vector<1x128xf32>
    %54 = arith.addf %51, %53 : vector<1x128xf32>
    %c0_41 = arith.constant 0 : index
    %c1_42 = arith.constant 1 : index
    %c0_43 = arith.constant 0 : index
    %55 = vector.load %arg5[%c0_41, %c1_42, %c0_43] : memref<1x8x128xf32, #tpu.memory_space<vmem>>, vector<1x1x128xf32>
    %56 = vector.shape_cast %55 : vector<1x1x128xf32> to vector<1x128xf32>
    %57 = vector.shape_cast %54 : vector<1x128xf32> to vector<1x1x128xf32>
    tpu.vector_store %arg5[%c0_41, %c1_42, %c0_43], %57 {strides = array<i32>} : memref<1x8x128xf32, #tpu.memory_space<vmem>>, vector<1x1x128xf32>,
    %c0_44 = arith.constant 0 : index
    %c0_45 = arith.constant 0 : index
    %c0_46 = arith.constant 0 : index
    %58 = vector.load %arg2[%c0_44, %c0_45, %c0_46] : memref<1x4x128xf32, #tpu.memory_space<vmem>>, vector<1x1x128xf32>
    %59 = vector.shape_cast %58 : vector<1x1x128xf32> to vector<1x128xf32>
    %c2_47 = arith.constant 2 : index
    %c0_48 = arith.constant 0 : index
    %60 = memref.load %arg3[%c2_47, %c0_48] : memref<8x4xf32, #tpu.memory_space<smem>>
    %61 = vector.broadcast %60 : f32 to vector<1x128xf32>
    %62 = arith.mulf %59, %61 : vector<1x128xf32>
    %c0_49 = arith.constant 0 : index
    %c1_50 = arith.constant 1 : index
    %c0_51 = arith.constant 0 : index
    %63 = vector.load %arg2[%c0_49, %c1_50, %c0_51] : memref<1x4x128xf32, #tpu.memory_space<vmem>>, vector<1x1x128xf32>
    %64 = vector.shape_cast %63 : vector<1x1x128xf32> to vector<1x128xf32>
    %c2_52 = arith.constant 2 : index
    %c1_53 = arith.constant 1 : index
    %65 = memref.load %arg3[%c2_52, %c1_53] : memref<8x4xf32, #tpu.memory_space<smem>>
    %66 = vector.broadcast %65 : f32 to vector<1x128xf32>
    %67 = arith.mulf %64, %66 : vector<1x128xf32>
    %68 = arith.addf %62, %67 : vector<1x128xf32>
    %c0_54 = arith.constant 0 : index
    %c2_55 = arith.constant 2 : index
    %c0_56 = arith.constant 0 : index
    %69 = vector.load %arg2[%c0_54, %c2_55, %c0_56] : memref<1x4x128xf32, #tpu.memory_space<vmem>>, vector<1x1x128xf32>
    %70 = vector.shape_cast %69 : vector<1x1x128xf32> to vector<1x128xf32>
    %c2_57 = arith.constant 2 : index
    %c2_58 = arith.constant 2 : index
    %71 = memref.load %arg3[%c2_57, %c2_58] : memref<8x4xf32, #tpu.memory_space<smem>>
    %72 = vector.broadcast %71 : f32 to vector<1x128xf32>
    %73 = arith.mulf %70, %72 : vector<1x128xf32>
    %74 = arith.addf %68, %73 : vector<1x128xf32>
    %c0_59 = arith.constant 0 : index
    %c3_60 = arith.constant 3 : index
    %c0_61 = arith.constant 0 : index
    %75 = vector.load %arg2[%c0_59, %c3_60, %c0_61] : memref<1x4x128xf32, #tpu.memory_space<vmem>>, vector<1x1x128xf32>
    %76 = vector.shape_cast %75 : vector<1x1x128xf32> to vector<1x128xf32>
    %c2_62 = arith.constant 2 : index
    %c3_63 = arith.constant 3 : index
    %77 = memref.load %arg3[%c2_62, %c3_63] : memref<8x4xf32, #tpu.memory_space<smem>>
    %78 = vector.broadcast %77 : f32 to vector<1x128xf32>
    %79 = arith.mulf %76, %78 : vector<1x128xf32>
    %80 = arith.addf %74, %79 : vector<1x128xf32>
    %c2_64 = arith.constant 2 : index
    %81 = memref.load %arg4[%c2_64] : memref<8xf32, #tpu.memory_space<smem>>
    %82 = vector.broadcast %81 : f32 to vector<1x128xf32>
    %83 = arith.addf %80, %82 : vector<1x128xf32>
    %c0_65 = arith.constant 0 : index
    %c2_66 = arith.constant 2 : index
    %c0_67 = arith.constant 0 : index
    %84 = vector.load %arg5[%c0_65, %c2_66, %c0_67] : memref<1x8x128xf32, #tpu.memory_space<vmem>>, vector<1x1x128xf32>
    %85 = vector.shape_cast %84 : vector<1x1x128xf32> to vector<1x128xf32>
    %86 = vector.shape_cast %83 : vector<1x128xf32> to vector<1x1x128xf32>
    tpu.vector_store %arg5[%c0_65, %c2_66, %c0_67], %86 {strides = array<i32>} : memref<1x8x128xf32, #tpu.memory_space<vmem>>, vector<1x1x128xf32>,
    %c0_68 = arith.constant 0 : index
    %c0_69 = arith.constant 0 : index
    %c0_70 = arith.constant 0 : index
    %87 = vector.load %arg2[%c0_68, %c0_69, %c0_70] : memref<1x4x128xf32, #tpu.memory_space<vmem>>, vector<1x1x128xf32>
    %88 = vector.shape_cast %87 : vector<1x1x128xf32> to vector<1x128xf32>
    %c3_71 = arith.constant 3 : index
    %c0_72 = arith.constant 0 : index
    %89 = memref.load %arg3[%c3_71, %c0_72] : memref<8x4xf32, #tpu.memory_space<smem>>
    %90 = vector.broadcast %89 : f32 to vector<1x128xf32>
    %91 = arith.mulf %88, %90 : vector<1x128xf32>
    %c0_73 = arith.constant 0 : index
    %c1_74 = arith.constant 1 : index
    %c0_75 = arith.constant 0 : index
    %92 = vector.load %arg2[%c0_73, %c1_74, %c0_75] : memref<1x4x128xf32, #tpu.memory_space<vmem>>, vector<1x1x128xf32>
    %93 = vector.shape_cast %92 : vector<1x1x128xf32> to vector<1x128xf32>
    %c3_76 = arith.constant 3 : index
    %c1_77 = arith.constant 1 : index
    %94 = memref.load %arg3[%c3_76, %c1_77] : memref<8x4xf32, #tpu.memory_space<smem>>
    %95 = vector.broadcast %94 : f32 to vector<1x128xf32>
    %96 = arith.mulf %93, %95 : vector<1x128xf32>
    %97 = arith.addf %91, %96 : vector<1x128xf32>
    %c0_78 = arith.constant 0 : index
    %c2_79 = arith.constant 2 : index
    %c0_80 = arith.constant 0 : index
    %98 = vector.load %arg2[%c0_78, %c2_79, %c0_80] : memref<1x4x128xf32, #tpu.memory_space<vmem>>, vector<1x1x128xf32>
    %99 = vector.shape_cast %98 : vector<1x1x128xf32> to vector<1x128xf32>
    %c3_81 = arith.constant 3 : index
    %c2_82 = arith.constant 2 : index
    %100 = memref.load %arg3[%c3_81, %c2_82] : memref<8x4xf32, #tpu.memory_space<smem>>
    %101 = vector.broadcast %100 : f32 to vector<1x128xf32>
    %102 = arith.mulf %99, %101 : vector<1x128xf32>
    %103 = arith.addf %97, %102 : vector<1x128xf32>
    %c0_83 = arith.constant 0 : index
    %c3_84 = arith.constant 3 : index
    %c0_85 = arith.constant 0 : index
    %104 = vector.load %arg2[%c0_83, %c3_84, %c0_85] : memref<1x4x128xf32, #tpu.memory_space<vmem>>, vector<1x1x128xf32>
    %105 = vector.shape_cast %104 : vector<1x1x128xf32> to vector<1x128xf32>
    %c3_86 = arith.constant 3 : index
    %c3_87 = arith.constant 3 : index
    %106 = memref.load %arg3[%c3_86, %c3_87] : memref<8x4xf32, #tpu.memory_space<smem>>
    %107 = vector.broadcast %106 : f32 to vector<1x128xf32>
    %108 = arith.mulf %105, %107 : vector<1x128xf32>
    %109 = arith.addf %103, %108 : vector<1x128xf32>
    %c3_88 = arith.constant 3 : index
    %110 = memref.load %arg4[%c3_88] : memref<8xf32, #tpu.memory_space<smem>>
    %111 = vector.broadcast %110 : f32 to vector<1x128xf32>
    %112 = arith.addf %109, %111 : vector<1x128xf32>
    %c0_89 = arith.constant 0 : index
    %c3_90 = arith.constant 3 : index
    %c0_91 = arith.constant 0 : index
    %113 = vector.load %arg5[%c0_89, %c3_90, %c0_91] : memref<1x8x128xf32, #tpu.memory_space<vmem>>, vector<1x1x128xf32>
    %114 = vector.shape_cast %113 : vector<1x1x128xf32> to vector<1x128xf32>
    %115 = vector.shape_cast %112 : vector<1x128xf32> to vector<1x1x128xf32>
    tpu.vector_store %arg5[%c0_89, %c3_90, %c0_91], %115 {strides = array<i32>} : memref<1x8x128xf32, #tpu.memory_space<vmem>>, vector<1x1x128xf32>,
    %c0_92 = arith.constant 0 : index
    %c0_93 = arith.constant 0 : index
    %c0_94 = arith.constant 0 : index
    %116 = vector.load %arg2[%c0_92, %c0_93, %c0_94] : memref<1x4x128xf32, #tpu.memory_space<vmem>>, vector<1x1x128xf32>
    %117 = vector.shape_cast %116 : vector<1x1x128xf32> to vector<1x128xf32>
    %c4 = arith.constant 4 : index
    %c0_95 = arith.constant 0 : index
    %118 = memref.load %arg3[%c4, %c0_95] : memref<8x4xf32, #tpu.memory_space<smem>>
    %119 = vector.broadcast %118 : f32 to vector<1x128xf32>
    %120 = arith.mulf %117, %119 : vector<1x128xf32>
    %c0_96 = arith.constant 0 : index
    %c1_97 = arith.constant 1 : index
    %c0_98 = arith.constant 0 : index
    %121 = vector.load %arg2[%c0_96, %c1_97, %c0_98] : memref<1x4x128xf32, #tpu.memory_space<vmem>>, vector<1x1x128xf32>
    %122 = vector.shape_cast %121 : vector<1x1x128xf32> to vector<1x128xf32>
    %c4_99 = arith.constant 4 : index
    %c1_100 = arith.constant 1 : index
    %123 = memref.load %arg3[%c4_99, %c1_100] : memref<8x4xf32, #tpu.memory_space<smem>>
    %124 = vector.broadcast %123 : f32 to vector<1x128xf32>
    %125 = arith.mulf %122, %124 : vector<1x128xf32>
    %126 = arith.addf %120, %125 : vector<1x128xf32>
    %c0_101 = arith.constant 0 : index
    %c2_102 = arith.constant 2 : index
    %c0_103 = arith.constant 0 : index
    %127 = vector.load %arg2[%c0_101, %c2_102, %c0_103] : memref<1x4x128xf32, #tpu.memory_space<vmem>>, vector<1x1x128xf32>
    %128 = vector.shape_cast %127 : vector<1x1x128xf32> to vector<1x128xf32>
    %c4_104 = arith.constant 4 : index
    %c2_105 = arith.constant 2 : index
    %129 = memref.load %arg3[%c4_104, %c2_105] : memref<8x4xf32, #tpu.memory_space<smem>>
    %130 = vector.broadcast %129 : f32 to vector<1x128xf32>
    %131 = arith.mulf %128, %130 : vector<1x128xf32>
    %132 = arith.addf %126, %131 : vector<1x128xf32>
    %c0_106 = arith.constant 0 : index
    %c3_107 = arith.constant 3 : index
    %c0_108 = arith.constant 0 : index
    %133 = vector.load %arg2[%c0_106, %c3_107, %c0_108] : memref<1x4x128xf32, #tpu.memory_space<vmem>>, vector<1x1x128xf32>
    %134 = vector.shape_cast %133 : vector<1x1x128xf32> to vector<1x128xf32>
    %c4_109 = arith.constant 4 : index
    %c3_110 = arith.constant 3 : index
    %135 = memref.load %arg3[%c4_109, %c3_110] : memref<8x4xf32, #tpu.memory_space<smem>>
    %136 = vector.broadcast %135 : f32 to vector<1x128xf32>
    %137 = arith.mulf %134, %136 : vector<1x128xf32>
    %138 = arith.addf %132, %137 : vector<1x128xf32>
    %c4_111 = arith.constant 4 : index
    %139 = memref.load %arg4[%c4_111] : memref<8xf32, #tpu.memory_space<smem>>
    %140 = vector.broadcast %139 : f32 to vector<1x128xf32>
    %141 = arith.addf %138, %140 : vector<1x128xf32>
    %c0_112 = arith.constant 0 : index
    %c4_113 = arith.constant 4 : index
    %c0_114 = arith.constant 0 : index
    %142 = vector.load %arg5[%c0_112, %c4_113, %c0_114] : memref<1x8x128xf32, #tpu.memory_space<vmem>>, vector<1x1x128xf32>
    %143 = vector.shape_cast %142 : vector<1x1x128xf32> to vector<1x128xf32>
    %144 = vector.shape_cast %141 : vector<1x128xf32> to vector<1x1x128xf32>
    tpu.vector_store %arg5[%c0_112, %c4_113, %c0_114], %144 {strides = array<i32>} : memref<1x8x128xf32, #tpu.memory_space<vmem>>, vector<1x1x128xf32>,
    %c0_115 = arith.constant 0 : index
    %c0_116 = arith.constant 0 : index
    %c0_117 = arith.constant 0 : index
    %145 = vector.load %arg2[%c0_115, %c0_116, %c0_117] : memref<1x4x128xf32, #tpu.memory_space<vmem>>, vector<1x1x128xf32>
    %146 = vector.shape_cast %145 : vector<1x1x128xf32> to vector<1x128xf32>
    %c5 = arith.constant 5 : index
    %c0_118 = arith.constant 0 : index
    %147 = memref.load %arg3[%c5, %c0_118] : memref<8x4xf32, #tpu.memory_space<smem>>
    %148 = vector.broadcast %147 : f32 to vector<1x128xf32>
    %149 = arith.mulf %146, %148 : vector<1x128xf32>
    %c0_119 = arith.constant 0 : index
    %c1_120 = arith.constant 1 : index
    %c0_121 = arith.constant 0 : index
    %150 = vector.load %arg2[%c0_119, %c1_120, %c0_121] : memref<1x4x128xf32, #tpu.memory_space<vmem>>, vector<1x1x128xf32>
    %151 = vector.shape_cast %150 : vector<1x1x128xf32> to vector<1x128xf32>
    %c5_122 = arith.constant 5 : index
    %c1_123 = arith.constant 1 : index
    %152 = memref.load %arg3[%c5_122, %c1_123] : memref<8x4xf32, #tpu.memory_space<smem>>
    %153 = vector.broadcast %152 : f32 to vector<1x128xf32>
    %154 = arith.mulf %151, %153 : vector<1x128xf32>
    %155 = arith.addf %149, %154 : vector<1x128xf32>
    %c0_124 = arith.constant 0 : index
    %c2_125 = arith.constant 2 : index
    %c0_126 = arith.constant 0 : index
    %156 = vector.load %arg2[%c0_124, %c2_125, %c0_126] : memref<1x4x128xf32, #tpu.memory_space<vmem>>, vector<1x1x128xf32>
    %157 = vector.shape_cast %156 : vector<1x1x128xf32> to vector<1x128xf32>
    %c5_127 = arith.constant 5 : index
    %c2_128 = arith.constant 2 : index
    %158 = memref.load %arg3[%c5_127, %c2_128] : memref<8x4xf32, #tpu.memory_space<smem>>
    %159 = vector.broadcast %158 : f32 to vector<1x128xf32>
    %160 = arith.mulf %157, %159 : vector<1x128xf32>
    %161 = arith.addf %155, %160 : vector<1x128xf32>
    %c0_129 = arith.constant 0 : index
    %c3_130 = arith.constant 3 : index
    %c0_131 = arith.constant 0 : index
    %162 = vector.load %arg2[%c0_129, %c3_130, %c0_131] : memref<1x4x128xf32, #tpu.memory_space<vmem>>, vector<1x1x128xf32>
    %163 = vector.shape_cast %162 : vector<1x1x128xf32> to vector<1x128xf32>
    %c5_132 = arith.constant 5 : index
    %c3_133 = arith.constant 3 : index
    %164 = memref.load %arg3[%c5_132, %c3_133] : memref<8x4xf32, #tpu.memory_space<smem>>
    %165 = vector.broadcast %164 : f32 to vector<1x128xf32>
    %166 = arith.mulf %163, %165 : vector<1x128xf32>
    %167 = arith.addf %161, %166 : vector<1x128xf32>
    %c5_134 = arith.constant 5 : index
    %168 = memref.load %arg4[%c5_134] : memref<8xf32, #tpu.memory_space<smem>>
    %169 = vector.broadcast %168 : f32 to vector<1x128xf32>
    %170 = arith.addf %167, %169 : vector<1x128xf32>
    %c0_135 = arith.constant 0 : index
    %c5_136 = arith.constant 5 : index
    %c0_137 = arith.constant 0 : index
    %171 = vector.load %arg5[%c0_135, %c5_136, %c0_137] : memref<1x8x128xf32, #tpu.memory_space<vmem>>, vector<1x1x128xf32>
    %172 = vector.shape_cast %171 : vector<1x1x128xf32> to vector<1x128xf32>
    %173 = vector.shape_cast %170 : vector<1x128xf32> to vector<1x1x128xf32>
    tpu.vector_store %arg5[%c0_135, %c5_136, %c0_137], %173 {strides = array<i32>} : memref<1x8x128xf32, #tpu.memory_space<vmem>>, vector<1x1x128xf32>,
    %c0_138 = arith.constant 0 : index
    %c0_139 = arith.constant 0 : index
    %c0_140 = arith.constant 0 : index
    %174 = vector.load %arg2[%c0_138, %c0_139, %c0_140] : memref<1x4x128xf32, #tpu.memory_space<vmem>>, vector<1x1x128xf32>
    %175 = vector.shape_cast %174 : vector<1x1x128xf32> to vector<1x128xf32>
    %c6 = arith.constant 6 : index
    %c0_141 = arith.constant 0 : index
    %176 = memref.load %arg3[%c6, %c0_141] : memref<8x4xf32, #tpu.memory_space<smem>>
    %177 = vector.broadcast %176 : f32 to vector<1x128xf32>
    %178 = arith.mulf %175, %177 : vector<1x128xf32>
    %c0_142 = arith.constant 0 : index
    %c1_143 = arith.constant 1 : index
    %c0_144 = arith.constant 0 : index
    %179 = vector.load %arg2[%c0_142, %c1_143, %c0_144] : memref<1x4x128xf32, #tpu.memory_space<vmem>>, vector<1x1x128xf32>
    %180 = vector.shape_cast %179 : vector<1x1x128xf32> to vector<1x128xf32>
    %c6_145 = arith.constant 6 : index
    %c1_146 = arith.constant 1 : index
    %181 = memref.load %arg3[%c6_145, %c1_146] : memref<8x4xf32, #tpu.memory_space<smem>>
    %182 = vector.broadcast %181 : f32 to vector<1x128xf32>
    %183 = arith.mulf %180, %182 : vector<1x128xf32>
    %184 = arith.addf %178, %183 : vector<1x128xf32>
    %c0_147 = arith.constant 0 : index
    %c2_148 = arith.constant 2 : index
    %c0_149 = arith.constant 0 : index
    %185 = vector.load %arg2[%c0_147, %c2_148, %c0_149] : memref<1x4x128xf32, #tpu.memory_space<vmem>>, vector<1x1x128xf32>
    %186 = vector.shape_cast %185 : vector<1x1x128xf32> to vector<1x128xf32>
    %c6_150 = arith.constant 6 : index
    %c2_151 = arith.constant 2 : index
    %187 = memref.load %arg3[%c6_150, %c2_151] : memref<8x4xf32, #tpu.memory_space<smem>>
    %188 = vector.broadcast %187 : f32 to vector<1x128xf32>
    %189 = arith.mulf %186, %188 : vector<1x128xf32>
    %190 = arith.addf %184, %189 : vector<1x128xf32>
    %c0_152 = arith.constant 0 : index
    %c3_153 = arith.constant 3 : index
    %c0_154 = arith.constant 0 : index
    %191 = vector.load %arg2[%c0_152, %c3_153, %c0_154] : memref<1x4x128xf32, #tpu.memory_space<vmem>>, vector<1x1x128xf32>
    %192 = vector.shape_cast %191 : vector<1x1x128xf32> to vector<1x128xf32>
    %c6_155 = arith.constant 6 : index
    %c3_156 = arith.constant 3 : index
    %193 = memref.load %arg3[%c6_155, %c3_156] : memref<8x4xf32, #tpu.memory_space<smem>>
    %194 = vector.broadcast %193 : f32 to vector<1x128xf32>
    %195 = arith.mulf %192, %194 : vector<1x128xf32>
    %196 = arith.addf %190, %195 : vector<1x128xf32>
    %c6_157 = arith.constant 6 : index
    %197 = memref.load %arg4[%c6_157] : memref<8xf32, #tpu.memory_space<smem>>
    %198 = vector.broadcast %197 : f32 to vector<1x128xf32>
    %199 = arith.addf %196, %198 : vector<1x128xf32>
    %c0_158 = arith.constant 0 : index
    %c6_159 = arith.constant 6 : index
    %c0_160 = arith.constant 0 : index
    %200 = vector.load %arg5[%c0_158, %c6_159, %c0_160] : memref<1x8x128xf32, #tpu.memory_space<vmem>>, vector<1x1x128xf32>
    %201 = vector.shape_cast %200 : vector<1x1x128xf32> to vector<1x128xf32>
    %202 = vector.shape_cast %199 : vector<1x128xf32> to vector<1x1x128xf32>
    tpu.vector_store %arg5[%c0_158, %c6_159, %c0_160], %202 {strides = array<i32>} : memref<1x8x128xf32, #tpu.memory_space<vmem>>, vector<1x1x128xf32>,
    %c0_161 = arith.constant 0 : index
    %c0_162 = arith.constant 0 : index
    %c0_163 = arith.constant 0 : index
    %203 = vector.load %arg2[%c0_161, %c0_162, %c0_163] : memref<1x4x128xf32, #tpu.memory_space<vmem>>, vector<1x1x128xf32>
    %204 = vector.shape_cast %203 : vector<1x1x128xf32> to vector<1x128xf32>
    %c7 = arith.constant 7 : index
    %c0_164 = arith.constant 0 : index
    %205 = memref.load %arg3[%c7, %c0_164] : memref<8x4xf32, #tpu.memory_space<smem>>
    %206 = vector.broadcast %205 : f32 to vector<1x128xf32>
    %207 = arith.mulf %204, %206 : vector<1x128xf32>
    %c0_165 = arith.constant 0 : index
    %c1_166 = arith.constant 1 : index
    %c0_167 = arith.constant 0 : index
    %208 = vector.load %arg2[%c0_165, %c1_166, %c0_167] : memref<1x4x128xf32, #tpu.memory_space<vmem>>, vector<1x1x128xf32>
    %209 = vector.shape_cast %208 : vector<1x1x128xf32> to vector<1x128xf32>
    %c7_168 = arith.constant 7 : index
    %c1_169 = arith.constant 1 : index
    %210 = memref.load %arg3[%c7_168, %c1_169] : memref<8x4xf32, #tpu.memory_space<smem>>
    %211 = vector.broadcast %210 : f32 to vector<1x128xf32>
    %212 = arith.mulf %209, %211 : vector<1x128xf32>
    %213 = arith.addf %207, %212 : vector<1x128xf32>
    %c0_170 = arith.constant 0 : index
    %c2_171 = arith.constant 2 : index
    %c0_172 = arith.constant 0 : index
    %214 = vector.load %arg2[%c0_170, %c2_171, %c0_172] : memref<1x4x128xf32, #tpu.memory_space<vmem>>, vector<1x1x128xf32>
    %215 = vector.shape_cast %214 : vector<1x1x128xf32> to vector<1x128xf32>
    %c7_173 = arith.constant 7 : index
    %c2_174 = arith.constant 2 : index
    %216 = memref.load %arg3[%c7_173, %c2_174] : memref<8x4xf32, #tpu.memory_space<smem>>
    %217 = vector.broadcast %216 : f32 to vector<1x128xf32>
    %218 = arith.mulf %215, %217 : vector<1x128xf32>
    %219 = arith.addf %213, %218 : vector<1x128xf32>
    %c0_175 = arith.constant 0 : index
    %c3_176 = arith.constant 3 : index
    %c0_177 = arith.constant 0 : index
    %220 = vector.load %arg2[%c0_175, %c3_176, %c0_177] : memref<1x4x128xf32, #tpu.memory_space<vmem>>, vector<1x1x128xf32>
    %221 = vector.shape_cast %220 : vector<1x1x128xf32> to vector<1x128xf32>
    %c7_178 = arith.constant 7 : index
    %c3_179 = arith.constant 3 : index
    %222 = memref.load %arg3[%c7_178, %c3_179] : memref<8x4xf32, #tpu.memory_space<smem>>
    %223 = vector.broadcast %222 : f32 to vector<1x128xf32>
    %224 = arith.mulf %221, %223 : vector<1x128xf32>
    %225 = arith.addf %219, %224 : vector<1x128xf32>
    %c7_180 = arith.constant 7 : index
    %226 = memref.load %arg4[%c7_180] : memref<8xf32, #tpu.memory_space<smem>>
    %227 = vector.broadcast %226 : f32 to vector<1x128xf32>
    %228 = arith.addf %225, %227 : vector<1x128xf32>
    %c0_181 = arith.constant 0 : index
    %c7_182 = arith.constant 7 : index
    %c0_183 = arith.constant 0 : index
    %229 = vector.load %arg5[%c0_181, %c7_182, %c0_183] : memref<1x8x128xf32, #tpu.memory_space<vmem>>, vector<1x1x128xf32>
    %230 = vector.shape_cast %229 : vector<1x1x128xf32> to vector<1x128xf32>
    %231 = vector.shape_cast %228 : vector<1x128xf32> to vector<1x1x128xf32>
    tpu.vector_store %arg5[%c0_181, %c7_182, %c0_183], %231 {strides = array<i32>} : memref<1x8x128xf32, #tpu.memory_space<vmem>>, vector<1x1x128xf32>,
    return
  }
  func.func @transform_0(%arg0: i32, %arg1: i32) -> (i32, i32, i32) {
    %c0_i32 = arith.constant 0 : i32
    %c0_i32_0 = arith.constant 0 : i32
    return %arg0, %c0_i32, %arg1 : i32, i32, i32
  }
  func.func @transform_1(%arg0: i32, %arg1: i32) -> (i32, i32) {
    %c0_i32 = arith.constant 0 : i32
    %c0_i32_0 = arith.constant 0 : i32
    %c0_i32_1 = arith.constant 0 : i32
    return %c0_i32, %c0_i32_0 : i32, i32
  }
  func.func @transform_2(%arg0: i32, %arg1: i32) -> i32 {
    %c0_i32 = arith.constant 0 : i32
    %c0_i32_0 = arith.constant 0 : i32
    return %c0_i32 : i32
  }
  func.func @transform_3(%arg0: i32, %arg1: i32) -> (i32, i32, i32) {
    %c0_i32 = arith.constant 0 : i32
    %c0_i32_0 = arith.constant 0 : i32
    return %arg0, %c0_i32, %arg1 : i32, i32, i32
  }
}

</mosaic_0001>

<llo_original>
// kernel: tpu_custom_call.1
$region0: #{tpu_custom_call.1}
  #allocation0 [shape = 'u32[]', space=smem, size = 0x4, offset = 0x4, fixed_abs, tag = 'smem constant byte address 0x4 - core index']
  #allocation1 [shape = 'u32[144,128]{1,0:T(1,128)}', space=vmem, size = 0x12000, scoped, tag = 'internal scratch']
  %s0 = inlined_call_operand.vmem [shape: f32[2,4,128], index: 0, kind: input, shape index: {}]
  %s1 = inlined_call_operand.vmem [shape: f32[8,4], index: 1, kind: input, shape index: {}]
  %s2 = inlined_call_operand.vmem [shape: f32[8], index: 2, kind: input, shape index: {}]
  %s3 = inlined_call_operand.hbm [shape: f32[2,8,128], index: 3, kind: output, shape index: {}]
  %s4 = sld [smem:[#allocation0]]
  $region53: #{tpu_custom_call.1} parent=0
    _
  %s6 = ssub.s32 1, %s4
  %s7 = scalar_select 0, %s6, %s4
  $region1: #{tpu_custom_call.1} parent=0
    #allocation2 [shape = 'u8[4096]{0}', space=smem, size = 0x1000, scoped, tag = 'input window, operand 1, single buffered']
    #allocation3 [shape = 's32[2]{0}', space=sflag, size = 0x8, scoped, tag = 'scoped memory for tpu_custom_call.1']
    #allocation4 [shape = 's32[2]{0}', space=sflag, size = 0x8, scoped, tag = 'scoped memory for tpu_custom_call.1']
    #allocation5 [shape = 'u8[512]{0}', space=smem, size = 0x200, scoped, tag = 'input window, operand 2, single buffered']
    #allocation6 [shape = 's32[1]{0}', space=sflag, size = 0x4, scoped, tag = 'scoped memory for tpu_custom_call.1']
    #allocation7 [shape = 'u8[8192]{0}', space=vmem, size = 0x2000, scoped, tag = 'output window, operand 0']
    %8 = vsyncpa [#allocation4], 0
    %9 = vsyncpa [#allocation6], 0
    %10 = vsyncpa [#allocation3], 0
    %s11 = scalar_lea.sflag [#allocation3], 1
    %12 = vsyncpa %s11, 0
    loop: start=0, step=1, limit=4
    $region2: #{tpu_custom_call.1} parent=1 // loop_pre_header
      _
    $region3: #{tpu_custom_call.1} parent=1 // loop_header
      %s14 = sphi 0, %s18
      %p15 = scmp.ge.s32.totalorder %s14, 4
      %s21 = sphi 0, %s33
      %s22 = sphi 0, %s29
      %s23 = sphi 0, %s21
      %s24 = sphi 0, %s22
      %s25 = sphi 0, %s23
      %s26 = sphi 0, %s24
      %s38 = sphi 0, %s40
      %s41 = sphi 0, %s38
      %s42 = sphi 0, %s41
      %s58 = sphi 0, %s42
      %s62 = sphi 0, %s62
      %s64 = sphi 0, %s62
      %s65 = sphi 0, %s64
      %s79 = sphi 0, %s65
      %s83 = sphi 0, %s83
      %s85 = sphi 0, %s83
      %s86 = sphi 0, %s85
      %s100 = sphi 0, %s86
      %s108 = sphi 0, %s110
      %s111 = sphi 0, %s108
      %s112 = sphi 0, %s111
      %s128 = sphi 0, %s112
    $region4: #{tpu_custom_call.1} parent=1 // loop_header_branch
      %17 = sbr.rel (%p15) target = $region8
    $region5: #{tpu_custom_call.1} parent=1 // loop_body
      %s19 = ssub.s32 %s14, 1
      %s20 = ssub.s32 %s14, 2
      %s27 = sadd.s32 1, %s22
      %p28 = scmp.ge.s32.totalorder %s27, 1
      %s29 = scalar_select %p28, 0, %s27
      %s30 = sadd.s32 1, %s21
      %s31 = scalar_select %p28, %s30, %s21
      %p32 = scmp.ge.s32.totalorder %s31, 2
      %s33 = scalar_select %p32, 0, %s31
      %s34 = ssub.s32 %s21, %s33
      %s35 = ssub.s32 %s22, %s29
      %s36 = sor.u32 %s34, %s35
      %p37 = scmp.eq.s32.totalorder %s36, 0
      %s39 = sadd.s32 %s38, 1
      %s40 = scalar_select %p37, %s38, %s39
      %p43 = pneg %p37
      %p44 = scmp.eq.s32.totalorder %s14, 1
      %p45 = por %p43, %p44
      %p46 = scmp.ne.s32.totalorder %s38, %s41
      %p47 = scmp.eq.s32.totalorder %s14, 0
      %p48 = por %p46, %p47
      %p49 = scmp.ne.s32.totalorder %s38, %s41
      %p50 = scmp.eq.s32.totalorder %s19, 1
      %p51 = por %p49, %p50
      %p52 = scmp.ne.s32.totalorder %s41, %s42
      %p53 = scmp.eq.s32.totalorder %s19, 0
      %p54 = por %p52, %p53
      %p55 = scmp.ne.s32.totalorder %s41, %s42
      %p56 = scmp.eq.s32.totalorder %s20, 1
      %p57 = por %p55, %p56
      %p59 = scmp.ne.s32.totalorder %s42, %s58
      %p60 = scmp.eq.s32.totalorder %s20, 0
      %p61 = por %p59, %p60
      %s63 = sadd.s32 %s62, 1
      %p66 = scmp.eq.s32.totalorder %s14, 1
      %p67 = scmp.ne.s32.totalorder %s62, %s64
      %p68 = scmp.eq.s32.totalorder %s14, 0
      %p69 = por %p67, %p68
      %p70 = scmp.ne.s32.totalorder %s62, %s64
      %p71 = scmp.eq.s32.totalorder %s19, 1
      %p72 = por %p70, %p71
      %p73 = scmp.ne.s32.totalorder %s64, %s65
      %p74 = scmp.eq.s32.totalorder %s19, 0
      %p75 = por %p73, %p74
      %p76 = scmp.ne.s32.totalorder %s64, %s65
      %p77 = scmp.eq.s32.totalorder %s20, 1
      %p78 = por %p76, %p77
      %p80 = scmp.ne.s32.totalorder %s65, %s79
      %p81 = scmp.eq.s32.totalorder %s20, 0
      %p82 = por %p80, %p81
      %s84 = sadd.s32 %s83, 1
      %p87 = scmp.eq.s32.totalorder %s14, 1
      %p88 = scmp.ne.s32.totalorder %s83, %s85
      %p89 = scmp.eq.s32.totalorder %s14, 0
      %p90 = por %p88, %p89
      %p91 = scmp.ne.s32.totalorder %s83, %s85
      %p92 = scmp.eq.s32.totalorder %s19, 1
      %p93 = por %p91, %p92
      %p94 = scmp.ne.s32.totalorder %s85, %s86
      %p95 = scmp.eq.s32.totalorder %s19, 0
      %p96 = por %p94, %p95
      %p97 = scmp.ne.s32.totalorder %s85, %s86
      %p98 = scmp.eq.s32.totalorder %s20, 1
      %p99 = por %p97, %p98
      %p101 = scmp.ne.s32.totalorder %s86, %s100
      %p102 = scmp.eq.s32.totalorder %s20, 0
      %p103 = por %p101, %p102
      %s104 = ssub.s32 %s21, %s33
      %s105 = ssub.s32 %s22, %s29
      %s106 = sor.u32 %s104, %s105
      %p107 = scmp.eq.s32.totalorder %s106, 0
      %s109 = sadd.s32 %s108, 1
      %s110 = scalar_select %p107, %s108, %s109
      %p113 = pneg %p107
      %p114 = scmp.eq.s32.totalorder %s14, 1
      %p115 = por %p113, %p114
      %p116 = scmp.ne.s32.totalorder %s108, %s111
      %p117 = scmp.eq.s32.totalorder %s14, 0
      %p118 = por %p116, %p117
      %p119 = scmp.ne.s32.totalorder %s108, %s111
      %p120 = scmp.eq.s32.totalorder %s19, 1
      %p121 = por %p119, %p120
      %p122 = scmp.ne.s32.totalorder %s111, %s112
      %p123 = scmp.eq.s32.totalorder %s19, 0
      %p124 = por %p122, %p123
      %p125 = scmp.ne.s32.totalorder %s111, %s112
      %p126 = scmp.eq.s32.totalorder %s20, 1
      %p127 = por %p125, %p126
      %p129 = scmp.ne.s32.totalorder %s112, %s128
      %p130 = scmp.eq.s32.totalorder %s20, 0
      %p131 = por %p129, %p130
      %p132 = scmp.le.s32.totalorder 1, %s14
      %p133 = scmp.lt.s32.totalorder %s14, 3
      %p134 = pnand %p132, %p133
      %p135 = pneg %p134
      // Predicated region
      $region9: #{tpu_custom_call.1} parent=5 // pred_check
        _
      $region10: #{tpu_custom_call.1} parent=5 // pred_check_branch
        %137 = sbr.rel (%p134) target = $region12
      $region11: #{tpu_custom_call.1} parent=5 // pred_region
        %s138 = ssub.s32 %s14, 1
        // Predicated region
        $region13: #{tpu_custom_call.1} parent=11 // pred_check
          %p139 = pneg %p75
        $region14: #{tpu_custom_call.1} parent=11 // pred_check_branch
          %141 = sbr.rel (%p139) target = $region16
        $region15: #{tpu_custom_call.1} parent=11 // pred_region
          %s143 = ssub.s32 128, 128
          %144 = vsyncadd [#allocation4], %s143
          %s146 = sshll.u32 %s1, 4
          %s147 = int_to_ptr.vmem [resolvable:$true] %s146
          %149 = dma.vmem_to_smem %s147, 128, [#allocation2], [#allocation4]
        $region16: #{tpu_custom_call.1} parent=11 // pred_fallthru
          _
        // Predicated region
        $region17: #{tpu_custom_call.1} parent=11 // pred_check
          %p150 = pneg %p96
        $region18: #{tpu_custom_call.1} parent=11 // pred_check_branch
          %152 = sbr.rel (%p150) target = $region20
        $region19: #{tpu_custom_call.1} parent=11 // pred_region
          %s154 = ssub.s32 16, 16
          %155 = vsyncadd [#allocation6], %s154
          %s157 = sshll.u32 %s2, 4
          %s158 = int_to_ptr.vmem [resolvable:$true] %s157
          %160 = dma.vmem_to_smem %s158, 16, [#allocation5], [#allocation6]
        $region20: #{tpu_custom_call.1} parent=11 // pred_fallthru
          _
      $region12: #{tpu_custom_call.1} parent=5 // pred_fallthru
        _
      %p161 = scmp.lt.s32.totalorder %s14, 2
      // Predicated region
      $region21: #{tpu_custom_call.1} parent=5 // pred_check
        %p162 = pneg %p161
      $region22: #{tpu_custom_call.1} parent=5 // pred_check_branch
        %164 = sbr.rel (%p162) target = $region24
      $region23: #{tpu_custom_call.1} parent=5 // pred_region
        // Predicated region
        $region25: #{tpu_custom_call.1} parent=23 // pred_check
          %p165 = pneg %p48
        $region26: #{tpu_custom_call.1} parent=23 // pred_check_branch
          %167 = sbr.rel (%p165) target = $region28
        $region27: #{tpu_custom_call.1} parent=23 // pred_region
          %p168 = scmp.lt.s32.totalorder %s21, 1
          %s169 = scalar_select %p168, %s21, 1
          %p170 = scmp.lt.s32.totalorder %s22, 0
          %s171 = scalar_select %p170, %s22, 0
          %s172 = sadd.s32 %s171, %s169
          %s173 = smul.addr %s172, 4
          %s174 = scalar_lea.vmem %s0, %s173
        $region28: #{tpu_custom_call.1} parent=23 // pred_fallthru
          _
      $region24: #{tpu_custom_call.1} parent=5 // pred_fallthru
        _
      %p175 = scmp.le.s32.totalorder 1, %s14
      %p176 = scmp.lt.s32.totalorder %s14, 3
      %p177 = pnand %p175, %p176
      %p178 = pneg %p177
      // Predicated region
      $region29: #{tpu_custom_call.1} parent=5 // pred_check
        _
      $region30: #{tpu_custom_call.1} parent=5 // pred_check_branch
        %180 = sbr.rel (%p177) target = $region32
      $region31: #{tpu_custom_call.1} parent=5 // pred_region
        %s181 = ssub.s32 %s14, 1
        // Predicated region
        $region33: #{tpu_custom_call.1} parent=31 // pred_check
          %p182 = pneg %p75
        $region34: #{tpu_custom_call.1} parent=31 // pred_check_branch
          %184 = sbr.rel (%p182) target = $region36
        $region35: #{tpu_custom_call.1} parent=31 // pred_region
          %185 = dma.done [#allocation4], 128
        $region36: #{tpu_custom_call.1} parent=31 // pred_fallthru
          _
        // Predicated region
        $region37: #{tpu_custom_call.1} parent=31 // pred_check
          %p186 = pneg %p96
        $region38: #{tpu_custom_call.1} parent=31 // pred_check_branch
          %188 = sbr.rel (%p186) target = $region40
        $region39: #{tpu_custom_call.1} parent=31 // pred_region
          %189 = dma.done [#allocation6], 16
        $region40: #{tpu_custom_call.1} parent=31 // pred_fallthru
          _
        %190 = sfence
        %p191 = scmp.lt.s32.totalorder %s23, 1
        %s192 = scalar_select %p191, %s23, 1
        %p193 = scmp.lt.s32.totalorder %s24, 0
        %s194 = scalar_select %p193, %s24, 0
        %s195 = sadd.s32 %s194, %s192
        %s196 = smul.addr %s195, 4
        %s197 = scalar_lea.vmem %s0, %s196
        %p198 = pneg %p54
        %p199 = pneg %p51
        %p200 = pneg %p75
        %p201 = pneg %p72
        %p202 = pneg %p96
        %p203 = pneg %p93
        %p204 = pneg %p124
        %p205 = pneg %p121
        %s206 = sand.u32 %s111, 1
        %s207 = scalar_lea.sflag [#allocation3], %s206
        %s208 = sand.u32 %s111, 1
        %s209 = smul.addr %s208, 8
        %s210 = scalar_lea.vmem [#allocation7], %s209
        %p211 = scmp.lt.s32.totalorder %s23, 1
        %s212 = scalar_select %p211, %s23, 1
        %p213 = scmp.lt.s32.totalorder %s24, 0
        %s214 = scalar_select %p213, %s24, 0
        %s215 = sadd.s32 %s214, %s212
        %s216 = smul.addr %s215, 4
        %s217 = scalar_lea.vmem %s0, %s216
        %v218 = vld [vmem:[%s217] sm:$0x1]
        %s219 = sld [smem:[#allocation2]]
        %v220 = vstv %s219
        %v221 = vmul.f32 %v218, %v220
        %v222 = vld [vmem:[%s217 + $0x1] sm:$0x1]
        %s223 = sld [smem:[#allocation2 + $0x1]]
        %v224 = vstv %s223
        %v225 = vmul.f32 %v222, %v224
        %v226 = vadd.f32 %v221, %v225
        %v227 = vld [vmem:[%s217 + $0x2] sm:$0x1]
        %s228 = sld [smem:[#allocation2 + $0x2]]
        %v229 = vstv %s228
        %v230 = vmul.f32 %v227, %v229
        %v231 = vadd.f32 %v226, %v230
        %v232 = vld [vmem:[%s217 + $0x3] sm:$0x1]
        %s233 = sld [smem:[#allocation2 + $0x3]]
        %v234 = vstv %s233
        %v235 = vmul.f32 %v232, %v234
        %v236 = vadd.f32 %v231, %v235
        %s237 = sld [smem:[#allocation5]]
        %v238 = vstv %s237
        %v239 = vadd.f32 %v236, %v238
        %240 = vst [vmem:[%s210] sm:$0x1] %v239
        %v241 = vld [vmem:[%s217] sm:$0x1]
        %s242 = sld [smem:[#allocation2 + $0x80]]
        %v243 = vstv %s242
        %v244 = vmul.f32 %v241, %v243
        %v245 = vld [vmem:[%s217 + $0x1] sm:$0x1]
        %s246 = sld [smem:[#allocation2 + $0x81]]
        %v247 = vstv %s246
        %v248 = vmul.f32 %v245, %v247
        %v249 = vadd.f32 %v244, %v248
        %v250 = vld [vmem:[%s217 + $0x2] sm:$0x1]
        %s251 = sld [smem:[#allocation2 + $0x82]]
        %v252 = vstv %s251
        %v253 = vmul.f32 %v250, %v252
        %v254 = vadd.f32 %v249, %v253
        %v255 = vld [vmem:[%s217 + $0x3] sm:$0x1]
        %s256 = sld [smem:[#allocation2 + $0x83]]
        %v257 = vstv %s256
        %v258 = vmul.f32 %v255, %v257
        %v259 = vadd.f32 %v254, %v258
        %s260 = sld [smem:[#allocation5 + $0x1]]
        %v261 = vstv %s260
        %v262 = vadd.f32 %v259, %v261
        %263 = vst [vmem:[%s210 + $0x1] sm:$0x1] %v262
        %v264 = vld [vmem:[%s217] sm:$0x1]
        %s265 = sld [smem:[#allocation2 + $0x100]]
        %v266 = vstv %s265
        %v267 = vmul.f32 %v264, %v266
        %v268 = vld [vmem:[%s217 + $0x1] sm:$0x1]
        %s269 = sld [smem:[#allocation2 + $0x101]]
        %v270 = vstv %s269
        %v271 = vmul.f32 %v268, %v270
        %v272 = vadd.f32 %v267, %v271
        %v273 = vld [vmem:[%s217 + $0x2] sm:$0x1]
        %s274 = sld [smem:[#allocation2 + $0x102]]
        %v275 = vstv %s274
        %v276 = vmul.f32 %v273, %v275
        %v277 = vadd.f32 %v272, %v276
        %v278 = vld [vmem:[%s217 + $0x3] sm:$0x1]
        %s279 = sld [smem:[#allocation2 + $0x103]]
        %v280 = vstv %s279
        %v281 = vmul.f32 %v278, %v280
        %v282 = vadd.f32 %v277, %v281
        %s283 = sld [smem:[#allocation5 + $0x2]]
        %v284 = vstv %s283
        %v285 = vadd.f32 %v282, %v284
        %286 = vst [vmem:[%s210 + $0x2] sm:$0x1] %v285
        %v287 = vld [vmem:[%s217] sm:$0x1]
        %s288 = sld [smem:[#allocation2 + $0x180]]
        %v289 = vstv %s288
        %v290 = vmul.f32 %v287, %v289
        %v291 = vld [vmem:[%s217 + $0x1] sm:$0x1]
        %s292 = sld [smem:[#allocation2 + $0x181]]
        %v293 = vstv %s292
        %v294 = vmul.f32 %v291, %v293
        %v295 = vadd.f32 %v290, %v294
        %v296 = vld [vmem:[%s217 + $0x2] sm:$0x1]
        %s297 = sld [smem:[#allocation2 + $0x182]]
        %v298 = vstv %s297
        %v299 = vmul.f32 %v296, %v298
        %v300 = vadd.f32 %v295, %v299
        %v301 = vld [vmem:[%s217 + $0x3] sm:$0x1]
        %s302 = sld [smem:[#allocation2 + $0x183]]
        %v303 = vstv %s302
        %v304 = vmul.f32 %v301, %v303
        %v305 = vadd.f32 %v300, %v304
        %s306 = sld [smem:[#allocation5 + $0x3]]
        %v307 = vstv %s306
        %v308 = vadd.f32 %v305, %v307
        %309 = vst [vmem:[%s210 + $0x3] sm:$0x1] %v308
        %v310 = vld [vmem:[%s217] sm:$0x1]
        %s311 = sld [smem:[#allocation2 + $0x200]]
        %v312 = vstv %s311
        %v313 = vmul.f32 %v310, %v312
        %v314 = vld [vmem:[%s217 + $0x1] sm:$0x1]
        %s315 = sld [smem:[#allocation2 + $0x201]]
        %v316 = vstv %s315
        %v317 = vmul.f32 %v314, %v316
        %v318 = vadd.f32 %v313, %v317
        %v319 = vld [vmem:[%s217 + $0x2] sm:$0x1]
        %s320 = sld [smem:[#allocation2 + $0x202]]
        %v321 = vstv %s320
        %v322 = vmul.f32 %v319, %v321
        %v323 = vadd.f32 %v318, %v322
        %v324 = vld [vmem:[%s217 + $0x3] sm:$0x1]
        %s325 = sld [smem:[#allocation2 + $0x203]]
        %v326 = vstv %s325
        %v327 = vmul.f32 %v324, %v326
        %v328 = vadd.f32 %v323, %v327
        %s329 = sld [smem:[#allocation5 + $0x4]]
        %v330 = vstv %s329
        %v331 = vadd.f32 %v328, %v330
        %332 = vst [vmem:[%s210 + $0x4] sm:$0x1] %v331
        %v333 = vld [vmem:[%s217] sm:$0x1]
        %s334 = sld [smem:[#allocation2 + $0x280]]
        %v335 = vstv %s334
        %v336 = vmul.f32 %v333, %v335
        %v337 = vld [vmem:[%s217 + $0x1] sm:$0x1]
        %s338 = sld [smem:[#allocation2 + $0x281]]
        %v339 = vstv %s338
        %v340 = vmul.f32 %v337, %v339
        %v341 = vadd.f32 %v336, %v340
        %v342 = vld [vmem:[%s217 + $0x2] sm:$0x1]
        %s343 = sld [smem:[#allocation2 + $0x282]]
        %v344 = vstv %s343
        %v345 = vmul.f32 %v342, %v344
        %v346 = vadd.f32 %v341, %v345
        %v347 = vld [vmem:[%s217 + $0x3] sm:$0x1]
        %s348 = sld [smem:[#allocation2 + $0x283]]
        %v349 = vstv %s348
        %v350 = vmul.f32 %v347, %v349
        %v351 = vadd.f32 %v346, %v350
        %s352 = sld [smem:[#allocation5 + $0x5]]
        %v353 = vstv %s352
        %v354 = vadd.f32 %v351, %v353
        %355 = vst [vmem:[%s210 + $0x5] sm:$0x1] %v354
        %v356 = vld [vmem:[%s217] sm:$0x1]
        %s357 = sld [smem:[#allocation2 + $0x300]]
        %v358 = vstv %s357
        %v359 = vmul.f32 %v356, %v358
        %v360 = vld [vmem:[%s217 + $0x1] sm:$0x1]
        %s361 = sld [smem:[#allocation2 + $0x301]]
        %v362 = vstv %s361
        %v363 = vmul.f32 %v360, %v362
        %v364 = vadd.f32 %v359, %v363
        %v365 = vld [vmem:[%s217 + $0x2] sm:$0x1]
        %s366 = sld [smem:[#allocation2 + $0x302]]
        %v367 = vstv %s366
        %v368 = vmul.f32 %v365, %v367
        %v369 = vadd.f32 %v364, %v368
        %v370 = vld [vmem:[%s217 + $0x3] sm:$0x1]
        %s371 = sld [smem:[#allocation2 + $0x303]]
        %v372 = vstv %s371
        %v373 = vmul.f32 %v370, %v372
        %v374 = vadd.f32 %v369, %v373
        %s375 = sld [smem:[#allocation5 + $0x6]]
        %v376 = vstv %s375
        %v377 = vadd.f32 %v374, %v376
        %378 = vst [vmem:[%s210 + $0x6] sm:$0x1] %v377
        %v379 = vld [vmem:[%s217] sm:$0x1]
        %s380 = sld [smem:[#allocation2 + $0x380]]
        %v381 = vstv %s380
        %v382 = vmul.f32 %v379, %v381
        %v383 = vld [vmem:[%s217 + $0x1] sm:$0x1]
        %s384 = sld [smem:[#allocation2 + $0x381]]
        %v385 = vstv %s384
        %v386 = vmul.f32 %v383, %v385
        %v387 = vadd.f32 %v382, %v386
        %v388 = vld [vmem:[%s217 + $0x2] sm:$0x1]
        %s389 = sld [smem:[#allocation2 + $0x382]]
        %v390 = vstv %s389
        %v391 = vmul.f32 %v388, %v390
        %v392 = vadd.f32 %v387, %v391
        %v393 = vld [vmem:[%s217 + $0x3] sm:$0x1]
        %s394 = sld [smem:[#allocation2 + $0x383]]
        %v395 = vstv %s394
        %v396 = vmul.f32 %v393, %v395
        %v397 = vadd.f32 %v392, %v396
        %s398 = sld [smem:[#allocation5 + $0x7]]
        %v399 = vstv %s398
        %v400 = vadd.f32 %v397, %v399
        %401 = vst [vmem:[%s210 + $0x7] sm:$0x1] %v400
        %s402 = sand.u32 %s111, 1
        %s403 = scalar_lea.sflag [#allocation3], %s402
        %s404 = sand.u32 %s111, 1
        %s405 = smul.addr %s404, 8
        %s406 = scalar_lea.vmem [#allocation7], %s405
        // Predicated region
        $region41: #{tpu_custom_call.1} parent=31 // pred_check
          %p407 = pneg %p121
        $region42: #{tpu_custom_call.1} parent=31 // pred_check_branch
          %409 = sbr.rel (%p407) target = $region44
        $region43: #{tpu_custom_call.1} parent=31 // pred_region
          %s411 = ssub.s32 128, 128
          %412 = vsyncadd %s403, %s411
          %s413 = sadd.s32 %s24, %s23
          %s414 = smul.addr %s413, 128
          %s415 = scalar_lea.hbm %s3, %s414
          %s417 = sshll.u32 %s406, 4
          %s418 = int_to_ptr.vmem [resolvable:$true] %s417
          %420 = dma.vmem_to_hbm [thread:$0]  %s418, 128, %s415, %s403
        $region44: #{tpu_custom_call.1} parent=31 // pred_fallthru
          _
      $region32: #{tpu_custom_call.1} parent=5 // pred_fallthru
        _
      %p421 = scmp.le.s32.totalorder 2, %s14
      // Predicated region
      $region45: #{tpu_custom_call.1} parent=5 // pred_check
        %p422 = pneg %p421
      $region46: #{tpu_custom_call.1} parent=5 // pred_check_branch
        %424 = sbr.rel (%p422) target = $region48
      $region47: #{tpu_custom_call.1} parent=5 // pred_region
        %s425 = ssub.s32 %s14, 2
        // Predicated region
        $region49: #{tpu_custom_call.1} parent=47 // pred_check
          %p426 = pneg %p127
        $region50: #{tpu_custom_call.1} parent=47 // pred_check_branch
          %428 = sbr.rel (%p426) target = $region52
        $region51: #{tpu_custom_call.1} parent=47 // pred_region
          %s429 = sand.u32 %s112, 1
          %s430 = scalar_lea.sflag [#allocation3], %s429
          %s431 = sand.u32 %s112, 1
          %s432 = smul.addr %s431, 8
          %s433 = scalar_lea.vmem [#allocation7], %s432
          %434 = dma.done %s430, 128
        $region52: #{tpu_custom_call.1} parent=47 // pred_fallthru
          _
      $region48: #{tpu_custom_call.1} parent=5 // pred_fallthru
        _
    $region6: #{tpu_custom_call.1} parent=1 // loop_footer
      %s18 = sadd.s32 1, %s14
    $region7: #{tpu_custom_call.1} parent=1 // loop_footer_branch
      %13 = sbr.rel target = $region3
    $region8: #{tpu_custom_call.1} parent=1 // loop_exit
      _
    %435 = vsyncpa [#allocation3], 1
    %s436 = scalar_lea.sflag [#allocation3], 1
    %437 = vsyncpa %s436, 1
    %438 = vsyncpa [#allocation4], 1
    %s439 = scalar_lea.sflag [#allocation4], 1
    %440 = vsyncpa %s439, 1
    %441 = vsyncpa [#allocation6], 1

</llo_original>
